<compile_context>
chip_gen: v5e
topology: v5e:2x2
jax: 0.10.0
libtpu: 0.0.40
codegen_flags: <defaults>
</compile_context>

<pallas_src>
import functools

import jax
import jax.numpy as jnp
from jax import lax
from jax.experimental import pallas as pl
from jax.experimental.pallas import tpu as pltpu


def _round_up(x, m):
    return ((x + m - 1) // m) * m


def _vmem_capacity_bytes():
    try:
        return int(pltpu.get_tpu_info().vmem_capacity_bytes)
    except Exception:
        return 64 * 1024 * 1024  # v7x-safe fallback (smallest VMEM of the target generations)


def _choose_tile_t(n_triples, k_dim, n_rel_pad):
    """Largest lane-aligned triple tile that fits a generation-aware VMEM budget."""
    cap = _vmem_capacity_bytes()
    budget = int(cap * 0.40)                 # ~51 MiB on v5e/v6e (128 MiB), ~25 MiB on v7x (64 MiB)
    budget -= 2 * n_rel_pad * k_dim * 2      # resident bf16 weights (counted double-buffered)
    per_triple = (2 * k_dim * 2              # bf16 feature stream, double-buffered
                  + 2 * 2 * 8 * 4            # relation-id + bias rows (8-sublane padded), x2 buffers
                  + 2 * 8 * 4                # output row, x2 buffers
                  + 4 * n_rel_pad * 4)       # f32 in-kernel intermediates (scores/iota/one-hot/...)
    tile = max(128, (budget // per_triple) // 128 * 128)
    tile = min(tile, 16384)                  # big enough that ~0.35us/step overhead is <~2%
    t128 = _round_up(max(n_triples, 1), 128)
    tile = min(tile, t128)
    if t128 >= 256:                          # keep >=2 grid steps so v7x megacore has work to split
        tile = min(tile, _round_up(-(-t128 // 2), 128))
    return max(128, tile)


def _vmem_limit_bytes(k_dim, tile_t, n_rel_pad):
    """Scoped VMEM limit derived from the actual footprint (+ headroom), capped below physical."""
    feat = 2 * k_dim * tile_t * 2            # bf16 features, double-buffered
    rows = 2 * 2 * 8 * tile_t * 4            # relation + bias rows
    outb = 2 * 8 * tile_t * 4                # output row
    wts = 2 * n_rel_pad * k_dim * 2          # resident weights (double-buffer worst case)
    mid = 4 * n_rel_pad * tile_t * 4         # in-kernel intermediates
    want = feat + rows + outb + wts + mid + (16 << 20)
    cap = _vmem_capacity_bytes()
    return int(min(cap - (8 << 20), max(32 << 20, want)))


def _score_kernel(x_ref, r_ref, b_ref, w_ref, out_ref):
    # x_ref:  (2*n_dim, tile_t)    bf16  fused subject|object features, triples on lanes
    # r_ref:  (1, tile_t)          i32   relation id per triple (-1 => invalid / padding)
    # b_ref:  (1, tile_t)          f32   per-triple bias (0 for invalid / padding)
    # w_ref:  (n_rel_pad, 2*n_dim) bf16  resident fused weight matrix
    # out_ref:(1, tile_t)          f32   lane-dense score row
    scores = jnp.dot(w_ref[...], x_ref[...], preferred_element_type=jnp.float32)  # (n_rel_pad, T)
    rel_ids = lax.broadcasted_iota(jnp.int32, scores.shape, 0)    # sublane index = relation id
    sel = (rel_ids == r_ref[...]).astype(scores.dtype)            # one-hot; all-zero if r == -1
    out_ref[...] = jnp.sum(sel * scores, axis=0, keepdims=True) + b_ref[...]


@functools.partial(jax.jit, static_argnames=("n_rel",))
def classifier_head_forward(embeddings, triples, weights, biases, *, n_rel):
    """embeddings: (N, n_dim) f32; triples: (3, T) int; weights: (n_rel, 2*n_dim) f32;
       biases: (n_rel,) f32 -> (T,) f32 scores (bf16 feature/weight streams, f32 accumulation)."""
    # TODO(synk): for n_rel in the many hundreds / thousands, switch to a relation-sorted grouped
    # matmul with PrefetchScalarGridSpec group offsets; compute-all-relations + one-hot select is
    # only the right trade-off for small/medium n_rel.
    n_dim = embeddings.shape[1]
    T = triples.shape[1]
    k_dim = 2 * n_dim
    n_rel_pad = max(8, _round_up(n_rel, 8))

    tile_t = _choose_tile_t(T, k_dim, n_rel_pad)
    t_pad = _round_up(T, tile_t)
    pad = t_pad - T

    # Pad the cheap index arrays (NOT the big feature matrices).
    s_idx = jnp.pad(triples[0, :], (0, pad)).astype(jnp.int32)
    o_idx = jnp.pad(triples[2, :], (0, pad)).astype(jnp.int32)
    r_idx = triples[1, :].astype(jnp.int32)
    valid = (r_idx >= 0) & (r_idx < n_rel)
    r_safe = jnp.where(valid, r_idx, -1)
    r_p = jnp.pad(r_safe, (0, pad), constant_values=-1)[None, :]             # (1, t_pad) i32

    # Per-triple bias row (exact f32); invalid relations get 0 so their prediction stays 0.
    b_row = jnp.where(valid, biases[jnp.where(valid, r_idx, 0)], 0.0)
    b_p = jnp.pad(b_row, (0, pad)).astype(jnp.float32)[None, :]              # (1, t_pad) f32

    # One combined gather from a bf16 table, then lay features out as (2*n_dim, t_pad) with
    # triples on the lane axis (subject rows stacked over object rows).
    emb_bf = embeddings.astype(jnp.bfloat16)
    gathered = emb_bf[jnp.concatenate([s_idx, o_idx]), :]                    # (2*t_pad, n_dim)
    x = gathered.reshape(2, t_pad, n_dim).transpose(0, 2, 1).reshape(k_dim, t_pad)
    # TODO(synk): verify in the HLO that the gather and the transpose fuse into one pass.

    # Fused, relation-padded weight matrix; padded rows are zero and never selected.
    w_pad = jnp.zeros((n_rel_pad, k_dim), jnp.float32).at[:n_rel].set(weights)
    w_bf = w_pad.astype(jnp.bfloat16)

    grid = (t_pad // tile_t,)
    x_spec = pl.BlockSpec((k_dim, tile_t), lambda i: (0, i))
    row_spec = pl.BlockSpec((1, tile_t), lambda i: (0, i))
    w_spec = pl.BlockSpec((n_rel_pad, k_dim), lambda i: (0, 0))              # resident across grid

    out = pl.pallas_call(
        _score_kernel,
        out_shape=jax.ShapeDtypeStruct((1, t_pad), jnp.float32),
        grid_spec=pltpu.PrefetchScalarGridSpec(
            num_scalar_prefetch=0,
            grid=grid,
            in_specs=[x_spec, row_spec, row_spec, w_spec],
            out_specs=pl.BlockSpec((1, tile_t), lambda i: (0, i)),
        ),
        compiler_params=pltpu.CompilerParams(
            dimension_semantics=("parallel",),
            vmem_limit_bytes=_vmem_limit_bytes(k_dim, tile_t, n_rel_pad),
        ),
    )(x, r_p, b_p, w_bf)

    return out[0, :T]


def init_params(key, n_rel, n_dim):
    """Deterministic init matching torch.nn.Linear(2*n_dim, 1) default (uniform +-1/sqrt(fan_in))."""
    in_features = 2 * n_dim
    bound = 1.0 / jnp.sqrt(float(in_features))
    kw, kb = jax.random.split(key)
    weights = jax.random.uniform(kw, (n_rel, in_features), jnp.float32, -bound, bound)
    biases = jax.random.uniform(kb, (n_rel,), jnp.float32, -bound, bound)
    return weights, biases


def reference_forward(embeddings, triples, weights, biases, n_rel):
    """Pure-f32 reference matching the torch loop."""
    s = embeddings[triples[0, :], :]
    o = embeddings[triples[2, :], :]
    r = triples[1, :]
    x = jnp.concatenate([s, o], axis=-1)
    valid = (r >= 0) & (r < n_rel)
    r_safe = jnp.where(valid, r, 0)
    p = jnp.sum(x * weights[r_safe], axis=-1) + biases[r_safe]
    return jnp.where(valid, p, 0.0)


if __name__ == "__main__":
    key = jax.random.PRNGKey(0)
    k_emb, k_trip, k_par = jax.random.split(key, 3)

    n_rel = 3
    n_dim = 32
    n_nodes = 10
    n_triples = 11  # deliberately not a multiple of 128 to exercise lane padding

    embeddings = jax.random.normal(k_emb, (n_nodes, n_dim), jnp.float32)
    ks, kr, ko = jax.random.split(k_trip, 3)
    triples = jnp.stack([
        jax.random.randint(ks, (n_triples,), 0, n_nodes),
        jax.random.randint(kr, (n_triples,), 0, n_rel),
        jax.random.randint(ko, (n_triples,), 0, n_nodes),
    ], axis=0).astype(jnp.int32)
    # One out-of-range relation id: the torch loop leaves its prediction at 0.
    triples = triples.at[1, 5].set(n_rel + 2)

    weights, biases = init_params(k_par, n_rel, n_dim)

    scores = classifier_head_forward(embeddings, triples, weights, biases, n_rel=n_rel)
    scores = jax.block_until_ready(scores)

    ref = reference_forward(embeddings, triples, weights, biases, n_rel)
    assert scores.shape == (n_triples,)
    # bf16 feature/weight streams with f32 accumulation: tolerance loosened vs exact f32.
    assert jnp.allclose(scores, ref, atol=2e-2, rtol=2e-2)
    assert float(scores[5]) == 0.0  # invalid relation id stays exactly 0

    print("KERNEL_OK")
</pallas_src>

<mosaic_0001>
module attributes {stable_mosaic.version = 11 : i64} {
  func.func @_score_kernel(%arg0: i32, %arg1: memref<64x128xbf16, #tpu.memory_space<vmem>>, %arg2: memref<1x128xi32, #tpu.memory_space<vmem>>, %arg3: memref<1x128xf32, #tpu.memory_space<vmem>>, %arg4: memref<8x64xbf16, #tpu.memory_space<vmem>>, %arg5: memref<1x128xf32, #tpu.memory_space<vmem>>) attributes {dimension_semantics = [#tpu.dimension_semantics<parallel>], iteration_bounds = array<i64: 1>, scalar_prefetch = 0 : i64, scratch_operands = 0 : i64, tpu.core_type = #tpu.core_type<tc>, window_params = [{transform_indices = @transform_0, window_bounds = array<i64: 64, 128>}, {transform_indices = @transform_1, window_bounds = array<i64: 1, 128>}, {transform_indices = @transform_2, window_bounds = array<i64: 1, 128>}, {pipeline_mode = #tpu.pipeline_mode<synchronous>, transform_indices = @transform_3, window_bounds = array<i64: 8, 64>}, {transform_indices = @transform_4, window_bounds = array<i64: 1, 128>}]} {
    %c0 = arith.constant 0 : index
    %c0_0 = arith.constant 0 : index
    %0 = vector.load %arg4[%c0, %c0_0] : memref<8x64xbf16, #tpu.memory_space<vmem>>, vector<8x64xbf16>
    %c0_1 = arith.constant 0 : index
    %c0_2 = arith.constant 0 : index
    %1 = vector.load %arg1[%c0_1, %c0_2] : memref<64x128xbf16, #tpu.memory_space<vmem>>, vector<64x128xbf16>
    %cst = arith.constant dense<0.000000e+00> : vector<8x128xf32>
    %2 = tpu.matmul %0, %1, %cst {dimension_numbers = #tpu.dot_dimension_numbers<[1], [0], [0], [1], [0, 0, 1, 1], [], []>} : vector<8x64xbf16>, vector<64x128xbf16>, vector<8x128xf32> -> vector<8x128xf32>
    %3 = tpu.iota {dimensions = array<i32: 0>} : vector<8x128xi32>
    %c0_3 = arith.constant 0 : index
    %c0_4 = arith.constant 0 : index
    %4 = vector.load %arg2[%c0_3, %c0_4] : memref<1x128xi32, #tpu.memory_space<vmem>>, vector<1x128xi32>
    %5 = vector.broadcast %4 : vector<1x128xi32> to vector<8x128xi32>
    %6 = arith.cmpi eq, %3, %5 : vector<8x128xi32>
    %7 = arith.extui %6 : vector<8x128xi1> to vector<8x128xi32>
    %8 = arith.sitofp %7 : vector<8x128xi32> to vector<8x128xf32>
    %9 = arith.mulf %8, %2 : vector<8x128xf32>
    %cst_5 = arith.constant dense<0.000000e+00> : vector<128xf32>
    %10 = vector.multi_reduction <add>, %9, %cst_5 [0] : vector<8x128xf32> to vector<128xf32>
    %11 = vector.shape_cast %10 : vector<128xf32> to vector<1x128xf32>
    %c0_6 = arith.constant 0 : index
    %c0_7 = arith.constant 0 : index
    %12 = vector.load %arg3[%c0_6, %c0_7] : memref<1x128xf32, #tpu.memory_space<vmem>>, vector<1x128xf32>
    %13 = arith.addf %11, %12 : vector<1x128xf32>
    %c0_8 = arith.constant 0 : index
    %c0_9 = arith.constant 0 : index
    %14 = vector.load %arg5[%c0_8, %c0_9] : memref<1x128xf32, #tpu.memory_space<vmem>>, vector<1x128xf32>
    tpu.vector_store %arg5[%c0_8, %c0_9], %13 {strides = array<i32>} : memref<1x128xf32, #tpu.memory_space<vmem>>, vector<1x128xf32>,
    return
  }
  func.func @transform_0(%arg0: i32) -> (i32, i32) {
    %c0_i32 = arith.constant 0 : i32
    %c0_i32_0 = arith.constant 0 : i32
    return %c0_i32, %arg0 : i32, i32
  }
  func.func @transform_1(%arg0: i32) -> (i32, i32) {
    %c0_i32 = arith.constant 0 : i32
    %c0_i32_0 = arith.constant 0 : i32
    return %c0_i32, %arg0 : i32, i32
  }
  func.func @transform_2(%arg0: i32) -> (i32, i32) {
    %c0_i32 = arith.constant 0 : i32
    %c0_i32_0 = arith.constant 0 : i32
    return %c0_i32, %arg0 : i32, i32
  }
  func.func @transform_3(%arg0: i32) -> (i32, i32) {
    %c0_i32 = arith.constant 0 : i32
    %c0_i32_0 = arith.constant 0 : i32
    %c0_i32_1 = arith.constant 0 : i32
    return %c0_i32, %c0_i32_0 : i32, i32
  }
  func.func @transform_4(%arg0: i32) -> (i32, i32) {
    %c0_i32 = arith.constant 0 : i32
    %c0_i32_0 = arith.constant 0 : i32
    return %c0_i32, %arg0 : i32, i32
  }
}

</mosaic_0001>

<llo_original>
// kernel: classifier_head_forward.1
$region0: #{classifier_head_forward.1}
  #allocation0 [shape = 'u32[]', space=smem, size = 0x4, offset = 0x4, fixed_abs, tag = 'smem constant byte address 0x4 - core index']
  #allocation1 [shape = 'u32[72,128]{1,0:T(1,128)}', space=vmem, size = 0x9000, scoped, tag = 'internal scratch']
  %s0 = inlined_call_operand.vmem [shape: bf16[64,128], index: 0, kind: input, shape index: {}]
  %s1 = inlined_call_operand.vmem [shape: s32[1,128], index: 1, kind: input, shape index: {}]
  %s2 = inlined_call_operand.vmem [shape: f32[1,128], index: 2, kind: input, shape index: {}]
  %s3 = inlined_call_operand.vmem [shape: bf16[8,64], index: 3, kind: input, shape index: {}]
  %s4 = inlined_call_operand.vmem [shape: f32[1,128], index: 4, kind: output, shape index: {}]
  %s5 = sld [smem:[#allocation0]]
  $region26: #{classifier_head_forward.1} parent=0
    _
  %s7 = ssub.s32 1, %s5
  %s8 = scalar_select 0, %s7, %s5
  // Predicated region
  $region2: #{classifier_head_forward.1} parent=0 // pred_check
    _
  $region3: #{classifier_head_forward.1} parent=0 // pred_check_branch
    %10 = sbr.rel (0) target = $region5
  $region4: #{classifier_head_forward.1} parent=0 // pred_region
    _
  $region5: #{classifier_head_forward.1} parent=0 // pred_fallthru
    _
  // Predicated region
  $region6: #{classifier_head_forward.1} parent=0 // pred_check
    _
  $region7: #{classifier_head_forward.1} parent=0 // pred_check_branch
    %12 = sbr.rel (0) target = $region9
  $region8: #{classifier_head_forward.1} parent=0 // pred_region
    _
  $region9: #{classifier_head_forward.1} parent=0 // pred_fallthru
    _
  // Predicated region
  $region10: #{classifier_head_forward.1} parent=0 // pred_check
    _
  $region11: #{classifier_head_forward.1} parent=0 // pred_check_branch
    %14 = sbr.rel (0) target = $region13
  $region12: #{classifier_head_forward.1} parent=0 // pred_region
    _
  $region13: #{classifier_head_forward.1} parent=0 // pred_fallthru
    _
  // Predicated region
  $region14: #{classifier_head_forward.1} parent=0 // pred_check
    _
  $region15: #{classifier_head_forward.1} parent=0 // pred_check_branch
    %16 = sbr.rel (0) target = $region17
  $region16: #{classifier_head_forward.1} parent=0 // pred_region
    _
  $region17: #{classifier_head_forward.1} parent=0 // pred_fallthru
    _
  %v18 = vld [vmem:[%s3] sm:$0xf]
  %v19 = vld [vmem:[%s0] sm:$0xf]
  %v20 = vld [vmem:[%s0 + $0x4] sm:$0xf]
  %v21 = vld [vmem:[%s0 + $0x8] sm:$0xf]
  %v22 = vld [vmem:[%s0 + $0xc] sm:$0xf]
  %v23 = vld [vmem:[%s0 + $0x10] sm:$0xf]
  %v24 = vld [vmem:[%s0 + $0x14] sm:$0xf]
  %v25 = vld [vmem:[%s0 + $0x18] sm:$0xf]
  %v26 = vld [vmem:[%s0 + $0x1c] sm:$0xf]
  %v35 = vunpack.c.l.b16 %v19
  %v36 = vunpack.c.l.b16 %v20
  %v37 = vunpack.c.l.b16 %v21
  %v38 = vunpack.c.l.b16 %v22
  %v39 = vunpack.c.l.b16 %v23
  %v40 = vunpack.c.l.b16 %v24
  %v41 = vunpack.c.l.b16 %v25
  %v42 = vunpack.c.l.b16 %v26
  %v43 = vpack.c.b16 %v36, %v35
  %v44 = vpack.c.b16 %v38, %v37
  %v45 = vpack.c.b16 %v40, %v39
  %v46 = vpack.c.b16 %v42, %v41
  %vm51 = vcmask 523264
  %v53 = vsel %vm51, %v18, 0
  %55 = vmatpush.bf16.msra.mxu0 0
  %56 = vmatpush.bf16.msra.mxu0 0
  %57 = vmatpush.bf16.msra.mxu0 0
  %58 = vmatpush.bf16.msra.mxu0 0
  %59 = vmatpush.bf16.msra.mxu0 %v46
  %60 = vmatpush.bf16.msra.mxu0 %v45
  %61 = vmatpush.bf16.msra.mxu0 %v44
  %62 = vmatpush.bf16.msra.mxu0 %v43
  %63 = vmatmul.bf16.gmra.mxu0 %v53
  %v64 = vpop.f32.mrf.mxu0
  %v65 = vadd.f32 0.0, %v64
  %v66 = vpop.f32.mrf.mxu0
  %67 = vdwg.mxu0
  %v68 = vlaneseq
  %v69 = vshrl.u32 %v68, 7
  %v70 = vld [vmem:[%s1] sm:$0x1]
  %v71 = vperm.slane %v70, 0
  %vm72 = vcmp.eq.s32.totalorder %v69, %v71
  %v73 = vsel %vm72, 1, 0
  %v74 = vcvt.s32.f32 %v73
  %v75 = vmul.f32 %v74, %v65
  %v76 = vrot.slane %v75, 4
  %v77 = vadd.f32 %v75, %v76
  %v78 = vrot.slane %v77, 2
  %v79 = vadd.f32 %v77, %v78
  %v80 = vrot.slane %v79, 1
  %v81 = vadd.f32 %v79, %v80
  %v82 = vld [vmem:[%s2] sm:$0x1]
  %v83 = vadd.f32 %v81, %v82
  %84 = vst [vmem:[%s4] sm:$0x1] %v83
  // Predicated region
  $region18: #{classifier_head_forward.1} parent=0 // pred_check
    _
  $region19: #{classifier_head_forward.1} parent=0 // pred_check_branch
    %86 = sbr.rel (0) target = $region21
  $region20: #{classifier_head_forward.1} parent=0 // pred_region
    _
  $region21: #{classifier_head_forward.1} parent=0 // pred_fallthru
    _
  // Predicated region
  $region22: #{classifier_head_forward.1} parent=0 // pred_check
    _
  $region23: #{classifier_head_forward.1} parent=0 // pred_check_branch
    %88 = sbr.rel (0) target = $region25
  $region24: #{classifier_head_forward.1} parent=0 // pred_region
    _
  $region25: #{classifier_head_forward.1} parent=0 // pred_fallthru
    _

</llo_original>
